<compile_context>
chip_gen: v7x
topology: tpu7x:2x2x1
jax: 0.10.0
libtpu: 0.0.40
codegen_flags: <defaults>
</compile_context>

<pallas_src>
import jax
import jax.numpy as jnp
from jax.experimental import pallas as pl
from jax.experimental.pallas import tpu as pltpu

LANES = 128          # lane width of a vreg; padded hidden feature dimension

# Packed parameter slab layout (rows x 128 lanes, all zero-padded):
W1_OFF = 0           # rows   0:8    -> W1 (4x16 valid in the top-left corner)
W2_OFF = 8           # rows   8:136  -> W2 (16x16 valid in the top-left corner)
W3_OFF = 136         # rows 136:264  -> W3 (16x2  valid in the top-left corner)
B_OFF = 264          # rows 264/265/266 -> b1 / b2 / b3 (16 / 16 / 2 valid lanes)
P_ROWS = 272         # total slab rows (multiple of 8)


def _round_up(n, m):
    return ((n + m - 1) // m) * m


def critic_kernel(x_ref, p_ref, o_ref):
    """Fused 3-layer MLP on one (tile_b, in_f) narrow activation tile.

    Zero padding keeps the math identical to the unpadded MLP: padded hidden
    lanes get zero weight columns + zero bias, relu(0) = 0 keeps them zero,
    and they hit zero weight rows in the next layer.
    """
    x = x_ref[...]                                    # (tile_b, in_f), narrow input
    in_f = x_ref.shape[1]

    w1 = p_ref[W1_OFF:W1_OFF + in_f, :]               # (in_f, 128)
    w2 = p_ref[W2_OFF:W2_OFF + LANES, :]              # (128, 128)
    w3 = p_ref[W3_OFF:W3_OFF + LANES, :]              # (128, 128)
    b1 = p_ref[B_OFF + 0:B_OFF + 1, :]                # (1, 128)
    b2 = p_ref[B_OFF + 1:B_OFF + 2, :]
    b3 = p_ref[B_OFF + 2:B_OFF + 3, :]

    h = jnp.maximum(jnp.dot(x, w1, preferred_element_type=jnp.float32) + b1, 0.0)
    h = jnp.maximum(jnp.dot(h, w2, preferred_element_type=jnp.float32) + b2, 0.0)
    out = jnp.dot(h, w3, preferred_element_type=jnp.float32) + b3   # (tile_b, 128)

    # Narrow store: only the valid output lanes go back to HBM.
    o_ref[...] = out[:, :o_ref.shape[1]].astype(o_ref.dtype)


def pack_params(params):
    """Pack (w1,b1,w2,b2,w3,b3) into one (272, 128) zero-padded f32 slab."""
    w1, b1 = params["w1"], params["b1"]
    w2, b2 = params["w2"], params["b2"]
    w3, b3 = params["w3"], params["b3"]

    p = jnp.zeros((P_ROWS, LANES), jnp.float32)
    p = p.at[W1_OFF:W1_OFF + w1.shape[0], :w1.shape[1]].set(w1)
    p = p.at[W2_OFF:W2_OFF + w2.shape[0], :w2.shape[1]].set(w2)
    p = p.at[W3_OFF:W3_OFF + w3.shape[0], :w3.shape[1]].set(w3)
    p = p.at[B_OFF + 0, :b1.shape[-1]].set(b1.reshape(-1))
    p = p.at[B_OFF + 1, :b2.shape[-1]].set(b2.reshape(-1))
    p = p.at[B_OFF + 2, :b3.shape[-1]].set(b3.reshape(-1))
    return p


def critic_forward(x, packed_params, *, out_features=2, block_b=2048):
    """x: (B, input_size) f32. packed_params: (272, 128) from pack_params."""
    B, f_in = x.shape
    assert f_in <= LANES and packed_params.shape == (P_ROWS, LANES)
    x = x.astype(jnp.float32)

    # Batch tiling: one tile for small batches; for B > 512 use >=2 balanced
    # tiles (so v7x can shard the parallel axis across both TensorCores),
    # each at most block_b rows (big tiles amortize the ~0.35us/step cost).
    if B <= 512:
        tile_b = _round_up(B, 8)
        nb = 1
    else:
        nb = max(2, pl.cdiv(B, block_b))
        tile_b = _round_up(pl.cdiv(B, nb), 8)
    b_pad = nb * tile_b

    # Only the batch dimension is (cheaply) row-padded when needed; the feature
    # dimension stays at its natural narrow width.
    x_in = x if b_pad == B else jnp.pad(x, ((0, b_pad - B), (0, 0)))

    out = pl.pallas_call(
        critic_kernel,
        out_shape=jax.ShapeDtypeStruct((b_pad, out_features), jnp.float32),
        grid=(nb,),
        in_specs=[
            pl.BlockSpec((tile_b, f_in), lambda i: (i, 0)),    # narrow, batch-tiled input
            pl.BlockSpec((P_ROWS, LANES), lambda i: (0, 0)),   # weights resident across steps
        ],
        out_specs=pl.BlockSpec((tile_b, out_features), lambda i: (i, 0)),  # narrow output
        compiler_params=pltpu.CompilerParams(
            dimension_semantics=("parallel",)),                # shard batch across TCs on v7x
    )(x_in, packed_params)

    return out if b_pad == B else out[:B]


def init_params(key, input_size, output_size):
    """Deterministic init mirroring PyTorch Linear's U(-1/sqrt(fan_in), +1/sqrt(fan_in))."""
    def linear(key, fan_in, fan_out):
        kw, kb = jax.random.split(key)
        bound = 1.0 / jnp.sqrt(jnp.float32(fan_in))
        # Stored already transposed: (in_features, out_features).
        w = jax.random.uniform(kw, (fan_in, fan_out), jnp.float32, -bound, bound)
        b = jax.random.uniform(kb, (1, fan_out), jnp.float32, -bound, bound)
        return w, b

    k1, k2, k3 = jax.random.split(key, 3)
    w1, b1 = linear(k1, input_size, 16)
    w2, b2 = linear(k2, 16, 16)
    w3, b3 = linear(k3, 16, output_size)
    return {"w1": w1, "b1": b1, "w2": w2, "b2": b2, "w3": w3, "b3": b3}


def critic_ref(x, params):
    """Pure-JAX reference for correctness checking."""
    h1 = jax.nn.relu(x @ params["w1"] + params["b1"])
    h2 = jax.nn.relu(h1 @ params["w2"] + params["b2"])
    return h2 @ params["w3"] + params["b3"]


if __name__ == "__main__":
    input_size = 4
    output_size = 2
    batch = 128   # amortize the launch over many environment states per call

    key = jax.random.PRNGKey(0)
    key_x, key_p = jax.random.split(key)

    x = jax.random.normal(key_x, (batch, input_size), jnp.float32)
    params = init_params(key_p, input_size, output_size)
    packed = pack_params(params)   # done once, reused every forward call

    out = critic_forward(x, packed, out_features=output_size)
    out = jax.block_until_ready(out)

    ref = critic_ref(x, params)
    assert out.shape == (batch, output_size)
    assert jnp.allclose(out, ref, atol=1e-4, rtol=1e-4), "mismatch vs pure-JAX reference"

    print("KERNEL_OK")
</pallas_src>

<mosaic_0001>
module attributes {stable_mosaic.version = 11 : i64} {
  func.func @critic_kernel(%arg0: i32, %arg1: memref<128x4xf32, #tpu.memory_space<vmem>>, %arg2: memref<272x128xf32, #tpu.memory_space<vmem>>, %arg3: memref<128x2xf32, #tpu.memory_space<vmem>>) attributes {dimension_semantics = [#tpu.dimension_semantics<parallel>], iteration_bounds = array<i64: 1>, scalar_prefetch = 0 : i64, scratch_operands = 0 : i64, tpu.core_type = #tpu.core_type<tc>, window_params = [{transform_indices = @transform_0, window_bounds = array<i64: 128, 4>}, {pipeline_mode = #tpu.pipeline_mode<synchronous>, transform_indices = @transform_1, window_bounds = array<i64: 272, 128>}, {transform_indices = @transform_2, window_bounds = array<i64: 128, 2>}]} {
    %c0 = arith.constant 0 : index
    %c0_0 = arith.constant 0 : index
    %0 = vector.load %arg1[%c0, %c0_0] : memref<128x4xf32, #tpu.memory_space<vmem>>, vector<128x4xf32>
    %c0_1 = arith.constant 0 : index
    %c0_2 = arith.constant 0 : index
    %1 = vector.load %arg2[%c0_1, %c0_2] : memref<272x128xf32, #tpu.memory_space<vmem>>, vector<4x128xf32>
    %c8 = arith.constant 8 : index
    %c0_3 = arith.constant 0 : index
    %2 = vector.load %arg2[%c8, %c0_3] : memref<272x128xf32, #tpu.memory_space<vmem>>, vector<128x128xf32>
    %c136 = arith.constant 136 : index
    %c0_4 = arith.constant 0 : index
    %3 = vector.load %arg2[%c136, %c0_4] : memref<272x128xf32, #tpu.memory_space<vmem>>, vector<128x128xf32>
    %c264 = arith.constant 264 : index
    %c0_5 = arith.constant 0 : index
    %4 = vector.load %arg2[%c264, %c0_5] : memref<272x128xf32, #tpu.memory_space<vmem>>, vector<1x128xf32>
    %c265 = arith.constant 265 : index
    %c0_6 = arith.constant 0 : index
    %5 = vector.load %arg2[%c265, %c0_6] : memref<272x128xf32, #tpu.memory_space<vmem>>, vector<1x128xf32>
    %c266 = arith.constant 266 : index
    %c0_7 = arith.constant 0 : index
    %6 = vector.load %arg2[%c266, %c0_7] : memref<272x128xf32, #tpu.memory_space<vmem>>, vector<1x128xf32>
    %cst = arith.constant dense<0.000000e+00> : vector<128x128xf32>
    %7 = tpu.matmul %0, %1, %cst {dimension_numbers = #tpu.dot_dimension_numbers<[1], [0], [0], [1], [0, 0, 1, 1], [], []>} : vector<128x4xf32>, vector<4x128xf32>, vector<128x128xf32> -> vector<128x128xf32>
    %8 = vector.broadcast %4 : vector<1x128xf32> to vector<128x128xf32>
    %9 = arith.addf %7, %8 : vector<128x128xf32>
    %cst_8 = arith.constant 0.000000e+00 : f32
    %10 = vector.broadcast %cst_8 : f32 to vector<128x128xf32>
    %11 = arith.maximumf %9, %10 : vector<128x128xf32>
    %cst_9 = arith.constant dense<0.000000e+00> : vector<128x128xf32>
    %12 = tpu.matmul %11, %2, %cst_9 {dimension_numbers = #tpu.dot_dimension_numbers<[1], [0], [0], [1], [0, 0, 1, 1], [], []>} : vector<128x128xf32>, vector<128x128xf32>, vector<128x128xf32> -> vector<128x128xf32>
    %13 = vector.broadcast %5 : vector<1x128xf32> to vector<128x128xf32>
    %14 = arith.addf %12, %13 : vector<128x128xf32>
    %cst_10 = arith.constant 0.000000e+00 : f32
    %15 = vector.broadcast %cst_10 : f32 to vector<128x128xf32>
    %16 = arith.maximumf %14, %15 : vector<128x128xf32>
    %cst_11 = arith.constant dense<0.000000e+00> : vector<128x128xf32>
    %17 = tpu.matmul %16, %3, %cst_11 {dimension_numbers = #tpu.dot_dimension_numbers<[1], [0], [0], [1], [0, 0, 1, 1], [], []>} : vector<128x128xf32>, vector<128x128xf32>, vector<128x128xf32> -> vector<128x128xf32>
    %18 = vector.broadcast %6 : vector<1x128xf32> to vector<128x128xf32>
    %19 = arith.addf %17, %18 : vector<128x128xf32>
    %20 = vector.extract_strided_slice %19 {offsets = [0, 0], sizes = [128, 2], strides = [1, 1]} : vector<128x128xf32> to vector<128x2xf32>
    %c0_12 = arith.constant 0 : index
    %c0_13 = arith.constant 0 : index
    %21 = vector.load %arg3[%c0_12, %c0_13] : memref<128x2xf32, #tpu.memory_space<vmem>>, vector<128x2xf32>
    tpu.vector_store %arg3[%c0_12, %c0_13], %20 {strides = array<i32>} : memref<128x2xf32, #tpu.memory_space<vmem>>, vector<128x2xf32>,
    return
  }
  func.func @transform_0(%arg0: i32) -> (i32, i32) {
    %c0_i32 = arith.constant 0 : i32
    %c0_i32_0 = arith.constant 0 : i32
    return %arg0, %c0_i32 : i32, i32
  }
  func.func @transform_1(%arg0: i32) -> (i32, i32) {
    %c0_i32 = arith.constant 0 : i32
    %c0_i32_0 = arith.constant 0 : i32
    %c0_i32_1 = arith.constant 0 : i32
    return %c0_i32, %c0_i32_0 : i32, i32
  }
  func.func @transform_2(%arg0: i32) -> (i32, i32) {
    %c0_i32 = arith.constant 0 : i32
    %c0_i32_0 = arith.constant 0 : i32
    return %arg0, %c0_i32 : i32, i32
  }
}

</mosaic_0001>

<llo_original>
// kernel: tpu_custom_call.1
$region0: #{tpu_custom_call.1}
  #allocation0 [shape = 'u32[]', space=smem, size = 0x4, offset = 0x4, fixed_abs, tag = 'smem constant byte address 0x4 - core index']
  #allocation1 [shape = 'u32[144,128]{1,0:T(1,128)}', space=vmem, size = 0x12000, scoped, tag = 'internal scratch']
  %s0 = inlined_call_operand.vmem [shape: f32[128,4], index: 0, kind: input, shape index: {}]
  %s1 = inlined_call_operand.hbm [shape: f32[272,128], index: 1, kind: input, shape index: {}]
  %s2 = inlined_call_operand.vmem [shape: f32[128,2], index: 2, kind: output, shape index: {}]
  %s3 = sld [smem:[#allocation0]]
  $region22: #{tpu_custom_call.1} parent=0
    _
  %s5 = ssub.s32 1, %s3
  %s6 = scalar_select 0, %s5, %s3
  $region1: #{tpu_custom_call.1} parent=0
    #allocation2 [shape = 'u8[139264]{0}', space=vmem, size = 0x22000, scoped, tag = 'input window, operand 1, single buffered']
    #allocation3 [shape = 's32[1]{0}', space=sflag, size = 0x4, scoped, tag = 'scoped memory for tpu_custom_call.1']
    %7 = vsyncpa [#allocation3], 0
    // Predicated region
    $region2: #{tpu_custom_call.1} parent=1 // pred_check
      _
    $region3: #{tpu_custom_call.1} parent=1 // pred_check_branch
      %9 = sbr.rel (0) target = $region5
    $region4: #{tpu_custom_call.1} parent=1 // pred_region
      _
    $region5: #{tpu_custom_call.1} parent=1 // pred_fallthru
      _
    // Predicated region
    $region6: #{tpu_custom_call.1} parent=1 // pred_check
      _
    $region7: #{tpu_custom_call.1} parent=1 // pred_check_branch
      %11 = sbr.rel (0) target = $region9
    $region8: #{tpu_custom_call.1} parent=1 // pred_region
      %s13 = ssub.s32 4352, 4352
      %14 = vsyncadd [#allocation3], %s13
      %s15 = sshll.u32 [#allocation2], 4
      %s16 = int_to_ptr.vmem [resolvable:$true] %s15
      %21 = dma.hbm_to_vmem [thread:$0]  %s1, 4352, %s16, [#allocation3], 128, 128, 8
    $region9: #{tpu_custom_call.1} parent=1 // pred_fallthru
      _
    // Predicated region
    $region10: #{tpu_custom_call.1} parent=1 // pred_check
      _
    $region11: #{tpu_custom_call.1} parent=1 // pred_check_branch
      %23 = sbr.rel (0) target = $region13
    $region12: #{tpu_custom_call.1} parent=1 // pred_region
      %24 = dma.done [#allocation3], 4352
    $region13: #{tpu_custom_call.1} parent=1 // pred_fallthru
      _
    %v25 = vld [vmem:[%s0] sm:$0xff]
    %v26 = vld [vmem:[%s0 + $0x8] sm:$0xff]
    %v27 = vld [vmem:[%s0 + $0x10] sm:$0xff]
    %v28 = vld [vmem:[%s0 + $0x18] sm:$0xff]
    %v29 = vld [vmem:[%s0 + $0x20] sm:$0xff]
    %v30 = vld [vmem:[%s0 + $0x28] sm:$0xff]
    %v31 = vld [vmem:[%s0 + $0x30] sm:$0xff]
    %v32 = vld [vmem:[%s0 + $0x38] sm:$0xff]
    %v33 = vld [vmem:[%s0 + $0x40] sm:$0xff]
    %v34 = vld [vmem:[%s0 + $0x48] sm:$0xff]
    %v35 = vld [vmem:[%s0 + $0x50] sm:$0xff]
    %v36 = vld [vmem:[%s0 + $0x58] sm:$0xff]
    %v37 = vld [vmem:[%s0 + $0x60] sm:$0xff]
    %v38 = vld [vmem:[%s0 + $0x68] sm:$0xff]
    %v39 = vld [vmem:[%s0 + $0x70] sm:$0xff]
    %v40 = vld [vmem:[%s0 + $0x78] sm:$0xff]
    %v41 = vld [vmem:[#allocation2] sm:$0xf]
    %v42 = vld [vmem:[#allocation2 + $0x8] sm:$0xff]
    %v43 = vld [vmem:[#allocation2 + $0x10] sm:$0xff]
    %v44 = vld [vmem:[#allocation2 + $0x18] sm:$0xff]
    %v45 = vld [vmem:[#allocation2 + $0x20] sm:$0xff]
    %v46 = vld [vmem:[#allocation2 + $0x28] sm:$0xff]
    %v47 = vld [vmem:[#allocation2 + $0x30] sm:$0xff]
    %v48 = vld [vmem:[#allocation2 + $0x38] sm:$0xff]
    %v49 = vld [vmem:[#allocation2 + $0x40] sm:$0xff]
    %v50 = vld [vmem:[#allocation2 + $0x48] sm:$0xff]
    %v51 = vld [vmem:[#allocation2 + $0x50] sm:$0xff]
    %v52 = vld [vmem:[#allocation2 + $0x58] sm:$0xff]
    %v53 = vld [vmem:[#allocation2 + $0x60] sm:$0xff]
    %v54 = vld [vmem:[#allocation2 + $0x68] sm:$0xff]
    %v55 = vld [vmem:[#allocation2 + $0x70] sm:$0xff]
    %v56 = vld [vmem:[#allocation2 + $0x78] sm:$0xff]
    %v57 = vld [vmem:[#allocation2 + $0x80] sm:$0xff]
    %v58 = vld [vmem:[#allocation2 + $0x88] sm:$0xff]
    %v59 = vld [vmem:[#allocation2 + $0x90] sm:$0xff]
    %v60 = vld [vmem:[#allocation2 + $0x98] sm:$0xff]
    %v61 = vld [vmem:[#allocation2 + $0xa0] sm:$0xff]
    %v62 = vld [vmem:[#allocation2 + $0xa8] sm:$0xff]
    %v63 = vld [vmem:[#allocation2 + $0xb0] sm:$0xff]
    %v64 = vld [vmem:[#allocation2 + $0xb8] sm:$0xff]
    %v65 = vld [vmem:[#allocation2 + $0xc0] sm:$0xff]
    %v66 = vld [vmem:[#allocation2 + $0xc8] sm:$0xff]
    %v67 = vld [vmem:[#allocation2 + $0xd0] sm:$0xff]
    %v68 = vld [vmem:[#allocation2 + $0xd8] sm:$0xff]
    %v69 = vld [vmem:[#allocation2 + $0xe0] sm:$0xff]
    %v70 = vld [vmem:[#allocation2 + $0xe8] sm:$0xff]
    %v71 = vld [vmem:[#allocation2 + $0xf0] sm:$0xff]
    %v72 = vld [vmem:[#allocation2 + $0xf8] sm:$0xff]
    %v73 = vld [vmem:[#allocation2 + $0x100] sm:$0xff]
    %v74 = vld [vmem:[#allocation2 + $0x108] sm:$0x1]
    %v75 = vld [vmem:[#allocation2 + $0x109] sm:$0x1]
    %v76 = vld [vmem:[#allocation2 + $0x10a] sm:$0x1]
    %v77 = vlaneseq
    %v78 = vshrl.u32 %v77, 7
    %v79 = vsub.s32 0, %v78
    %v80 = vrot.slane %v74, %v79
    %vm81 = vcmask 31744
    %v83 = vsel %vm81, %v25, 0
    %v86 = vsel %vm81, %v26, 0
    %v89 = vsel %vm81, %v27, 0
    %v92 = vsel %vm81, %v28, 0
    %v95 = vsel %vm81, %v29, 0
    %v98 = vsel %vm81, %v30, 0
    %v101 = vsel %vm81, %v31, 0
    %v104 = vsel %vm81, %v32, 0
    %v107 = vsel %vm81, %v33, 0
    %v110 = vsel %vm81, %v34, 0
    %v113 = vsel %vm81, %v35, 0
    %v116 = vsel %vm81, %v36, 0
    %v119 = vsel %vm81, %v37, 0
    %v122 = vsel %vm81, %v38, 0
    %v125 = vsel %vm81, %v39, 0
    %v128 = vsel %vm81, %v40, 0
    %vm130 = vcmask 1043456
    %v132 = vsel %vm130, %v41, 0
    %134 = vmatprep.subr.mxu0 0.0
    %135 = vmatpush1.msra.mxu0 %v132
    %136 = vmatprep.subr.mxu0 0.0
    %137 = vmatpush1.msra.mxu0 0.0
    %138 = vmatprep.subr.mxu0 0.0
    %139 = vmatpush1.msra.mxu0 0.0
    %140 = vmatprep.subr.mxu0 0.0
    %141 = vmatpush1.msra.mxu0 0.0
    %142 = vmatprep.subr.mxu0 0.0
    %143 = vmatpush1.msra.mxu0 0.0
    %144 = vmatprep.subr.mxu0 0.0
    %145 = vmatpush1.msra.mxu0 0.0
    %146 = vmatprep.subr.mxu0 0.0
    %147 = vmatpush1.msra.mxu0 0.0
    %148 = vmatprep.subr.mxu0 0.0
    %149 = vmatpush1.msra.mxu0 0.0
    %150 = vmatprep.subr.mxu0 0.0
    %151 = vmatpush1.msra.mxu0 0.0
    %152 = vmatprep.subr.mxu0 0.0
    %153 = vmatpush1.msra.mxu0 0.0
    %154 = vmatprep.subr.mxu0 0.0
    %155 = vmatpush1.msra.mxu0 0.0
    %156 = vmatprep.subr.mxu0 0.0
    %157 = vmatpush1.msra.mxu0 0.0
    %158 = vmatprep.subr.mxu0 0.0
    %159 = vmatpush1.msra.mxu0 0.0
    %160 = vmatprep.subr.mxu0 0.0
    %161 = vmatpush1.msra.mxu0 0.0
    %162 = vmatprep.subr.mxu0 0.0
    %163 = vmatpush1.msra.mxu0 0.0
    %164 = vmatprep.subr.mxu0 0.0
    %165 = vmatpush1.msra.mxu0 0.0
    %166 = vmatprep.subr.mxu0 0.0
    %167 = vmatpush1.msra.mxu0 0.0
    %168 = vmatprep.subr.mxu0 0.0
    %169 = vmatpush1.msra.mxu0 0.0
    %170 = vmatprep.subr.mxu0 0.0
    %171 = vmatpush1.msra.mxu0 0.0
    %172 = vmatprep.subr.mxu0 0.0
    %173 = vmatpush1.msra.mxu0 0.0
    %174 = vmatprep.subr.mxu0 0.0
    %175 = vmatpush1.msra.mxu0 0.0
    %176 = vmatprep.subr.mxu0 0.0
    %177 = vmatpush1.msra.mxu0 0.0
    %178 = vmatprep.subr.mxu0 0.0
    %179 = vmatpush1.msra.mxu0 0.0
    %180 = vmatprep.subr.mxu0 0.0
    %181 = vmatpush1.msra.mxu0 0.0
    %182 = vmatprep.subr.mxu0 0.0
    %183 = vmatpush1.msra.mxu0 0.0
    %184 = vmatprep.subr.mxu0 0.0
    %185 = vmatpush1.msra.mxu0 0.0
    %186 = vmatprep.subr.mxu0 0.0
    %187 = vmatpush1.msra.mxu0 0.0
    %188 = vmatprep.subr.mxu0 0.0
    %189 = vmatpush1.msra.mxu0 0.0
    %190 = vmatprep.subr.mxu0 0.0
    %191 = vmatpush1.msra.mxu0 0.0
    %192 = vmatprep.subr.mxu0 0.0
    %193 = vmatpush1.msra.mxu0 0.0
    %194 = vmatprep.subr.mxu0 0.0
    %195 = vmatpush1.msra.mxu0 0.0
    %196 = vmatprep.subr.mxu0 0.0
    %197 = vmatpush1.msra.mxu0 0.0
    %198 = vmatprep.mubr.f32.mxu0 0.0
    %199 = vmatmul.mubr.f32.gmra.mrb[0].mxu0 %v83
    %v200 = vpop.f32.mrb[0].mxu0
    %v201 = vadd.f32 %v80, %v200
    %v202 = vpop.f32.mrb[0].mxu0
    %203 = vmatprep.mubr.f32.mxu0 0.0
    %204 = vmatmul.mubr.f32.gmra.mrb[0].mxu0 %v86
    %v205 = vpop.f32.mrb[0].mxu0
    %v206 = vadd.f32 %v80, %v205
    %v207 = vpop.f32.mrb[0].mxu0
    %208 = vmatprep.mubr.f32.mxu0 0.0
    %209 = vmatmul.mubr.f32.gmra.mrb[0].mxu0 %v89
    %v210 = vpop.f32.mrb[0].mxu0
    %v211 = vadd.f32 %v80, %v210
    %v212 = vpop.f32.mrb[0].mxu0
    %213 = vmatprep.mubr.f32.mxu0 0.0
    %214 = vmatmul.mubr.f32.gmra.mrb[0].mxu0 %v92
    %v215 = vpop.f32.mrb[0].mxu0
    %v216 = vadd.f32 %v80, %v215
    %v217 = vpop.f32.mrb[0].mxu0
    %218 = vmatprep.mubr.f32.mxu0 0.0
    %219 = vmatmul.mubr.f32.gmra.mrb[0].mxu0 %v95
    %v220 = vpop.f32.mrb[0].mxu0
    %v221 = vadd.f32 %v80, %v220
    %v222 = vpop.f32.mrb[0].mxu0
    %223 = vmatprep.mubr.f32.mxu0 0.0
    %224 = vmatmul.mubr.f32.gmra.mrb[0].mxu0 %v98
    %v225 = vpop.f32.mrb[0].mxu0
    %v226 = vadd.f32 %v80, %v225
    %v227 = vpop.f32.mrb[0].mxu0
    %228 = vmatprep.mubr.f32.mxu0 0.0
    %229 = vmatmul.mubr.f32.gmra.mrb[0].mxu0 %v101
    %v230 = vpop.f32.mrb[0].mxu0
    %v231 = vadd.f32 %v80, %v230
    %v232 = vpop.f32.mrb[0].mxu0
    %233 = vmatprep.mubr.f32.mxu0 0.0
    %234 = vmatmul.mubr.f32.gmra.mrb[0].mxu0 %v104
    %v235 = vpop.f32.mrb[0].mxu0
    %v236 = vadd.f32 %v80, %v235
    %v237 = vpop.f32.mrb[0].mxu0
    %238 = vmatprep.mubr.f32.mxu0 0.0
    %239 = vmatmul.mubr.f32.gmra.mrb[0].mxu0 %v107
    %v240 = vpop.f32.mrb[0].mxu0
    %v241 = vadd.f32 %v80, %v240
    %v242 = vpop.f32.mrb[0].mxu0
    %243 = vmatprep.mubr.f32.mxu0 0.0
    %244 = vmatmul.mubr.f32.gmra.mrb[0].mxu0 %v110
    %v245 = vpop.f32.mrb[0].mxu0
    %v246 = vadd.f32 %v80, %v245
    %v247 = vpop.f32.mrb[0].mxu0
    %248 = vmatprep.mubr.f32.mxu0 0.0
    %249 = vmatmul.mubr.f32.gmra.mrb[0].mxu0 %v113
    %v250 = vpop.f32.mrb[0].mxu0
    %v251 = vadd.f32 %v80, %v250
    %v252 = vpop.f32.mrb[0].mxu0
    %253 = vmatprep.mubr.f32.mxu0 0.0
    %254 = vmatmul.mubr.f32.gmra.mrb[0].mxu0 %v116
    %v255 = vpop.f32.mrb[0].mxu0
    %v256 = vadd.f32 %v80, %v255
    %v257 = vpop.f32.mrb[0].mxu0
    %258 = vmatprep.mubr.f32.mxu0 0.0
    %259 = vmatmul.mubr.f32.gmra.mrb[0].mxu0 %v119
    %v260 = vpop.f32.mrb[0].mxu0
    %v261 = vadd.f32 %v80, %v260
    %v262 = vpop.f32.mrb[0].mxu0
    %263 = vmatprep.mubr.f32.mxu0 0.0
    %264 = vmatmul.mubr.f32.gmra.mrb[0].mxu0 %v122
    %v265 = vpop.f32.mrb[0].mxu0
    %v266 = vadd.f32 %v80, %v265
    %v267 = vpop.f32.mrb[0].mxu0
    %268 = vmatprep.mubr.f32.mxu0 0.0
    %269 = vmatmul.mubr.f32.gmra.mrb[0].mxu0 %v125
    %v270 = vpop.f32.mrb[0].mxu0
    %v271 = vadd.f32 %v80, %v270
    %v272 = vpop.f32.mrb[0].mxu0
    %273 = vmatprep.mubr.f32.mxu0 0.0
    %274 = vmatmul.mubr.f32.gmra.mrb[0].mxu0 %v128
    %v275 = vpop.f32.mrb[0].mxu0
    %v276 = vadd.f32 %v80, %v275
    %v277 = vpop.f32.mrb[0].mxu0
    %278 = vdwg.mxu0
    %v279 = vmax.f32 %v201, 0.0
    %v280 = vmax.f32 %v206, 0.0
    %v281 = vmax.f32 %v211, 0.0
    %v282 = vmax.f32 %v216, 0.0
    %v283 = vmax.f32 %v221, 0.0
    %v284 = vmax.f32 %v226, 0.0
    %v285 = vmax.f32 %v231, 0.0
    %v286 = vmax.f32 %v236, 0.0
    %v287 = vmax.f32 %v241, 0.0
    %v288 = vmax.f32 %v246, 0.0
    %v289 = vmax.f32 %v251, 0.0
    %v290 = vmax.f32 %v256, 0.0
    %v291 = vmax.f32 %v261, 0.0
    %v292 = vmax.f32 %v266, 0.0
    %v293 = vmax.f32 %v271, 0.0
    %v294 = vmax.f32 %v276, 0.0
    %v295 = vlaneseq
    %v296 = vshrl.u32 %v295, 7
    %v297 = vsub.s32 0, %v296
    %v298 = vrot.slane %v75, %v297
    %299 = vmatprep.subr.mxu0 0.0
    %300 = vmatpush1.msra.mxu0 %v42
    %301 = vmatprep.subr.mxu0 0.0
    %302 = vmatpush1.msra.mxu0 %v43
    %303 = vmatprep.subr.mxu0 0.0
    %304 = vmatpush1.msra.mxu0 %v44
    %305 = vmatprep.subr.mxu0 0.0
    %306 = vmatpush1.msra.mxu0 %v45
    %307 = vmatprep.subr.mxu0 0.0
    %308 = vmatpush1.msra.mxu0 %v46
    %309 = vmatprep.subr.mxu0 0.0
    %310 = vmatpush1.msra.mxu0 %v47
    %311 = vmatprep.subr.mxu0 0.0
    %312 = vmatpush1.msra.mxu0 %v48
    %313 = vmatprep.subr.mxu0 0.0
    %314 = vmatpush1.msra.mxu0 %v49
    %315 = vmatprep.subr.mxu0 0.0
    %316 = vmatpush1.msra.mxu0 %v50
    %317 = vmatprep.subr.mxu0 0.0
    %318 = vmatpush1.msra.mxu0 %v51
    %319 = vmatprep.subr.mxu0 0.0
    %320 = vmatpush1.msra.mxu0 %v52
    %321 = vmatprep.subr.mxu0 0.0
    %322 = vmatpush1.msra.mxu0 %v53
    %323 = vmatprep.subr.mxu0 0.0
    %324 = vmatpush1.msra.mxu0 %v54
    %325 = vmatprep.subr.mxu0 0.0
    %326 = vmatpush1.msra.mxu0 %v55
    %327 = vmatprep.subr.mxu0 0.0
    %328 = vmatpush1.msra.mxu0 %v56
    %329 = vmatprep.subr.mxu0 0.0
    %330 = vmatpush1.msra.mxu0 %v57
    %331 = vmatprep.subr.mxu0 0.0
    %332 = vmatpush1.msra.mxu0 0.0
    %333 = vmatprep.subr.mxu0 0.0
    %334 = vmatpush1.msra.mxu0 0.0
    %335 = vmatprep.subr.mxu0 0.0
    %336 = vmatpush1.msra.mxu0 0.0
    %337 = vmatprep.subr.mxu0 0.0
    %338 = vmatpush1.msra.mxu0 0.0
    %339 = vmatprep.subr.mxu0 0.0
    %340 = vmatpush1.msra.mxu0 0.0
    %341 = vmatprep.subr.mxu0 0.0
    %342 = vmatpush1.msra.mxu0 0.0
    %343 = vmatprep.subr.mxu0 0.0
    %344 = vmatpush1.msra.mxu0 0.0
    %345 = vmatprep.subr.mxu0 0.0
    %346 = vmatpush1.msra.mxu0 0.0
    %347 = vmatprep.subr.mxu0 0.0
    %348 = vmatpush1.msra.mxu0 0.0
    %349 = vmatprep.subr.mxu0 0.0
    %350 = vmatpush1.msra.mxu0 0.0
    %351 = vmatprep.subr.mxu0 0.0
    %352 = vmatpush1.msra.mxu0 0.0
    %353 = vmatprep.subr.mxu0 0.0
    %354 = vmatpush1.msra.mxu0 0.0
    %355 = vmatprep.subr.mxu0 0.0
    %356 = vmatpush1.msra.mxu0 0.0
    %357 = vmatprep.subr.mxu0 0.0
    %358 = vmatpush1.msra.mxu0 0.0
    %359 = vmatprep.subr.mxu0 0.0
    %360 = vmatpush1.msra.mxu0 0.0
    %361 = vmatprep.subr.mxu0 0.0
    %362 = vmatpush1.msra.mxu0 0.0
    %363 = vmatprep.mubr.f32.mxu0 0.0
    %364 = vmatmul.mubr.f32.gmra.mrb[0].mxu0 %v279
    %v365 = vpop.f32.mrb[0].mxu0
    %v366 = vadd.f32 %v298, %v365
    %v367 = vpop.f32.mrb[0].mxu0
    %368 = vmatprep.mubr.f32.mxu0 0.0
    %369 = vmatmul.mubr.f32.gmra.mrb[0].mxu0 %v280
    %v370 = vpop.f32.mrb[0].mxu0
    %v371 = vadd.f32 %v298, %v370
    %v372 = vpop.f32.mrb[0].mxu0
    %373 = vmatprep.mubr.f32.mxu0 0.0
    %374 = vmatmul.mubr.f32.gmra.mrb[0].mxu0 %v281
    %v375 = vpop.f32.mrb[0].mxu0
    %v376 = vadd.f32 %v298, %v375
    %v377 = vpop.f32.mrb[0].mxu0
    %378 = vmatprep.mubr.f32.mxu0 0.0
    %379 = vmatmul.mubr.f32.gmra.mrb[0].mxu0 %v282
    %v380 = vpop.f32.mrb[0].mxu0
    %v381 = vadd.f32 %v298, %v380
    %v382 = vpop.f32.mrb[0].mxu0
    %383 = vmatprep.mubr.f32.mxu0 0.0
    %384 = vmatmul.mubr.f32.gmra.mrb[0].mxu0 %v283
    %v385 = vpop.f32.mrb[0].mxu0
    %v386 = vadd.f32 %v298, %v385
    %v387 = vpop.f32.mrb[0].mxu0
    %388 = vmatprep.mubr.f32.mxu0 0.0
    %389 = vmatmul.mubr.f32.gmra.mrb[0].mxu0 %v284
    %v390 = vpop.f32.mrb[0].mxu0
    %v391 = vadd.f32 %v298, %v390
    %v392 = vpop.f32.mrb[0].mxu0
    %393 = vmatprep.mubr.f32.mxu0 0.0
    %394 = vmatmul.mubr.f32.gmra.mrb[0].mxu0 %v285
    %v395 = vpop.f32.mrb[0].mxu0
    %v396 = vadd.f32 %v298, %v395
    %v397 = vpop.f32.mrb[0].mxu0
    %398 = vmatprep.mubr.f32.mxu0 0.0
    %399 = vmatmul.mubr.f32.gmra.mrb[0].mxu0 %v286
    %v400 = vpop.f32.mrb[0].mxu0
    %v401 = vadd.f32 %v298, %v400
    %v402 = vpop.f32.mrb[0].mxu0
    %403 = vmatprep.mubr.f32.mxu0 0.0
    %404 = vmatmul.mubr.f32.gmra.mrb[0].mxu0 %v287
    %v405 = vpop.f32.mrb[0].mxu0
    %v406 = vadd.f32 %v298, %v405
    %v407 = vpop.f32.mrb[0].mxu0
    %408 = vmatprep.mubr.f32.mxu0 0.0
    %409 = vmatmul.mubr.f32.gmra.mrb[0].mxu0 %v288
    %v410 = vpop.f32.mrb[0].mxu0
    %v411 = vadd.f32 %v298, %v410
    %v412 = vpop.f32.mrb[0].mxu0
    %413 = vmatprep.mubr.f32.mxu0 0.0
    %414 = vmatmul.mubr.f32.gmra.mrb[0].mxu0 %v289
    %v415 = vpop.f32.mrb[0].mxu0
    %v416 = vadd.f32 %v298, %v415
    %v417 = vpop.f32.mrb[0].mxu0
    %418 = vmatprep.mubr.f32.mxu0 0.0
    %419 = vmatmul.mubr.f32.gmra.mrb[0].mxu0 %v290
    %v420 = vpop.f32.mrb[0].mxu0
    %v421 = vadd.f32 %v298, %v420
    %v422 = vpop.f32.mrb[0].mxu0
    %423 = vmatprep.mubr.f32.mxu0 0.0
    %424 = vmatmul.mubr.f32.gmra.mrb[0].mxu0 %v291
    %v425 = vpop.f32.mrb[0].mxu0
    %v426 = vadd.f32 %v298, %v425
    %v427 = vpop.f32.mrb[0].mxu0
    %428 = vmatprep.mubr.f32.mxu0 0.0
    %429 = vmatmul.mubr.f32.gmra.mrb[0].mxu0 %v292
    %v430 = vpop.f32.mrb[0].mxu0
    %v431 = vadd.f32 %v298, %v430
    %v432 = vpop.f32.mrb[0].mxu0
    %433 = vmatprep.mubr.f32.mxu0 0.0
    %434 = vmatmul.mubr.f32.gmra.mrb[0].mxu0 %v293
    %v435 = vpop.f32.mrb[0].mxu0
    %v436 = vadd.f32 %v298, %v435
    %v437 = vpop.f32.mrb[0].mxu0
    %438 = vmatprep.mubr.f32.mxu0 0.0
    %439 = vmatmul.mubr.f32.gmra.mrb[0].mxu0 %v294
    %v440 = vpop.f32.mrb[0].mxu0
    %v441 = vadd.f32 %v298, %v440
    %v442 = vpop.f32.mrb[0].mxu0
    %443 = vdwg.mxu0
    %v444 = vmax.f32 %v366, 0.0
    %v445 = vmax.f32 %v371, 0.0
    %v446 = vmax.f32 %v376, 0.0
    %v447 = vmax.f32 %v381, 0.0
    %v448 = vmax.f32 %v386, 0.0
    %v449 = vmax.f32 %v391, 0.0
    %v450 = vmax.f32 %v396, 0.0
    %v451 = vmax.f32 %v401, 0.0
    %v452 = vmax.f32 %v406, 0.0
    %v453 = vmax.f32 %v411, 0.0
    %v454 = vmax.f32 %v416, 0.0
    %v455 = vmax.f32 %v421, 0.0
    %v456 = vmax.f32 %v426, 0.0
    %v457 = vmax.f32 %v431, 0.0
    %v458 = vmax.f32 %v436, 0.0
    %v459 = vmax.f32 %v441, 0.0
    %v460 = vlaneseq
    %v461 = vshrl.u32 %v460, 7
    %v462 = vsub.s32 0, %v461
    %v463 = vrot.slane %v76, %v462
    %464 = vmatprep.subr.mxu0 0.0
    %465 = vmatpush1.msra.mxu0 %v58
    %466 = vmatprep.subr.mxu0 0.0
    %467 = vmatpush1.msra.mxu0 %v59
    %468 = vmatprep.subr.mxu0 0.0
    %469 = vmatpush1.msra.mxu0 %v60
    %470 = vmatprep.subr.mxu0 0.0
    %471 = vmatpush1.msra.mxu0 %v61
    %472 = vmatprep.subr.mxu0 0.0
    %473 = vmatpush1.msra.mxu0 %v62
    %474 = vmatprep.subr.mxu0 0.0
    %475 = vmatpush1.msra.mxu0 %v63
    %476 = vmatprep.subr.mxu0 0.0
    %477 = vmatpush1.msra.mxu0 %v64
    %478 = vmatprep.subr.mxu0 0.0
    %479 = vmatpush1.msra.mxu0 %v65
    %480 = vmatprep.subr.mxu0 0.0
    %481 = vmatpush1.msra.mxu0 %v66
    %482 = vmatprep.subr.mxu0 0.0
    %483 = vmatpush1.msra.mxu0 %v67
    %484 = vmatprep.subr.mxu0 0.0
    %485 = vmatpush1.msra.mxu0 %v68
    %486 = vmatprep.subr.mxu0 0.0
    %487 = vmatpush1.msra.mxu0 %v69
    %488 = vmatprep.subr.mxu0 0.0
    %489 = vmatpush1.msra.mxu0 %v70
    %490 = vmatprep.subr.mxu0 0.0
    %491 = vmatpush1.msra.mxu0 %v71
    %492 = vmatprep.subr.mxu0 0.0
    %493 = vmatpush1.msra.mxu0 %v72
    %494 = vmatprep.subr.mxu0 0.0
    %495 = vmatpush1.msra.mxu0 %v73
    %496 = vmatprep.subr.mxu0 0.0
    %497 = vmatpush1.msra.mxu0 0.0
    %498 = vmatprep.subr.mxu0 0.0
    %499 = vmatpush1.msra.mxu0 0.0
    %500 = vmatprep.subr.mxu0 0.0
    %501 = vmatpush1.msra.mxu0 0.0
    %502 = vmatprep.subr.mxu0 0.0
    %503 = vmatpush1.msra.mxu0 0.0
    %504 = vmatprep.subr.mxu0 0.0
    %505 = vmatpush1.msra.mxu0 0.0
    %506 = vmatprep.subr.mxu0 0.0
    %507 = vmatpush1.msra.mxu0 0.0
    %508 = vmatprep.subr.mxu0 0.0
    %509 = vmatpush1.msra.mxu0 0.0
    %510 = vmatprep.subr.mxu0 0.0
    %511 = vmatpush1.msra.mxu0 0.0
    %512 = vmatprep.subr.mxu0 0.0
    %513 = vmatpush1.msra.mxu0 0.0
    %514 = vmatprep.subr.mxu0 0.0
    %515 = vmatpush1.msra.mxu0 0.0
    %516 = vmatprep.subr.mxu0 0.0
    %517 = vmatpush1.msra.mxu0 0.0
    %518 = vmatprep.subr.mxu0 0.0
    %519 = vmatpush1.msra.mxu0 0.0
    %520 = vmatprep.subr.mxu0 0.0
    %521 = vmatpush1.msra.mxu0 0.0
    %522 = vmatprep.subr.mxu0 0.0
    %523 = vmatpush1.msra.mxu0 0.0
    %524 = vmatprep.subr.mxu0 0.0
    %525 = vmatpush1.msra.mxu0 0.0
    %526 = vmatprep.subr.mxu0 0.0
    %527 = vmatpush1.msra.mxu0 0.0
    %528 = vmatprep.mubr.f32.mxu0 0.0
    %529 = vmatmul.mubr.f32.gmra.mrb[0].mxu0 %v444
    %v530 = vpop.f32.mrb[0].mxu0
    %v531 = vadd.f32 %v463, %v530
    %v532 = vpop.f32.mrb[0].mxu0
    %533 = vmatprep.mubr.f32.mxu0 0.0
    %534 = vmatmul.mubr.f32.gmra.mrb[0].mxu0 %v445
    %v535 = vpop.f32.mrb[0].mxu0
    %v536 = vadd.f32 %v463, %v535
    %v537 = vpop.f32.mrb[0].mxu0
    %538 = vmatprep.mubr.f32.mxu0 0.0
    %539 = vmatmul.mubr.f32.gmra.mrb[0].mxu0 %v446
    %v540 = vpop.f32.mrb[0].mxu0
    %v541 = vadd.f32 %v463, %v540
    %v542 = vpop.f32.mrb[0].mxu0
    %543 = vmatprep.mubr.f32.mxu0 0.0
    %544 = vmatmul.mubr.f32.gmra.mrb[0].mxu0 %v447
    %v545 = vpop.f32.mrb[0].mxu0
    %v546 = vadd.f32 %v463, %v545
    %v547 = vpop.f32.mrb[0].mxu0
    %548 = vmatprep.mubr.f32.mxu0 0.0
    %549 = vmatmul.mubr.f32.gmra.mrb[0].mxu0 %v448
    %v550 = vpop.f32.mrb[0].mxu0
    %v551 = vadd.f32 %v463, %v550
    %v552 = vpop.f32.mrb[0].mxu0
    %553 = vmatprep.mubr.f32.mxu0 0.0
    %554 = vmatmul.mubr.f32.gmra.mrb[0].mxu0 %v449
    %v555 = vpop.f32.mrb[0].mxu0
    %v556 = vadd.f32 %v463, %v555
    %v557 = vpop.f32.mrb[0].mxu0
    %558 = vmatprep.mubr.f32.mxu0 0.0
    %559 = vmatmul.mubr.f32.gmra.mrb[0].mxu0 %v450
    %v560 = vpop.f32.mrb[0].mxu0
    %v561 = vadd.f32 %v463, %v560
    %v562 = vpop.f32.mrb[0].mxu0
    %563 = vmatprep.mubr.f32.mxu0 0.0
    %564 = vmatmul.mubr.f32.gmra.mrb[0].mxu0 %v451
    %v565 = vpop.f32.mrb[0].mxu0
    %v566 = vadd.f32 %v463, %v565
    %v567 = vpop.f32.mrb[0].mxu0
    %568 = vmatprep.mubr.f32.mxu0 0.0
    %569 = vmatmul.mubr.f32.gmra.mrb[0].mxu0 %v452
    %v570 = vpop.f32.mrb[0].mxu0
    %v571 = vadd.f32 %v463, %v570
    %v572 = vpop.f32.mrb[0].mxu0
    %573 = vmatprep.mubr.f32.mxu0 0.0
    %574 = vmatmul.mubr.f32.gmra.mrb[0].mxu0 %v453
    %v575 = vpop.f32.mrb[0].mxu0
    %v576 = vadd.f32 %v463, %v575
    %v577 = vpop.f32.mrb[0].mxu0
    %578 = vmatprep.mubr.f32.mxu0 0.0
    %579 = vmatmul.mubr.f32.gmra.mrb[0].mxu0 %v454
    %v580 = vpop.f32.mrb[0].mxu0
    %v581 = vadd.f32 %v463, %v580
    %v582 = vpop.f32.mrb[0].mxu0
    %583 = vmatprep.mubr.f32.mxu0 0.0
    %584 = vmatmul.mubr.f32.gmra.mrb[0].mxu0 %v455
    %v585 = vpop.f32.mrb[0].mxu0
    %v586 = vadd.f32 %v463, %v585
    %v587 = vpop.f32.mrb[0].mxu0
    %588 = vmatprep.mubr.f32.mxu0 0.0
    %589 = vmatmul.mubr.f32.gmra.mrb[0].mxu0 %v456
    %v590 = vpop.f32.mrb[0].mxu0
    %v591 = vadd.f32 %v463, %v590
    %v592 = vpop.f32.mrb[0].mxu0
    %593 = vmatprep.mubr.f32.mxu0 0.0
    %594 = vmatmul.mubr.f32.gmra.mrb[0].mxu0 %v457
    %v595 = vpop.f32.mrb[0].mxu0
    %v596 = vadd.f32 %v463, %v595
    %v597 = vpop.f32.mrb[0].mxu0
    %598 = vmatprep.mubr.f32.mxu0 0.0
    %599 = vmatmul.mubr.f32.gmra.mrb[0].mxu0 %v458
    %v600 = vpop.f32.mrb[0].mxu0
    %v601 = vadd.f32 %v463, %v600
    %v602 = vpop.f32.mrb[0].mxu0
    %603 = vmatprep.mubr.f32.mxu0 0.0
    %604 = vmatmul.mubr.f32.gmra.mrb[0].mxu0 %v459
    %v605 = vpop.f32.mrb[0].mxu0
    %v606 = vadd.f32 %v463, %v605
    %v607 = vpop.f32.mrb[0].mxu0
    %608 = vdwg.mxu0
    %vm609 = vcmask 15360
    %610 = vst.msk [vmem:[%s2] sm:$0xff] %vm609, %v531
    %611 = vst.msk [vmem:[%s2 + $0x8] sm:$0xff] %vm609, %v536
    %612 = vst.msk [vmem:[%s2 + $0x10] sm:$0xff] %vm609, %v541
    %613 = vst.msk [vmem:[%s2 + $0x18] sm:$0xff] %vm609, %v546
    %614 = vst.msk [vmem:[%s2 + $0x20] sm:$0xff] %vm609, %v551
    %615 = vst.msk [vmem:[%s2 + $0x28] sm:$0xff] %vm609, %v556
    %616 = vst.msk [vmem:[%s2 + $0x30] sm:$0xff] %vm609, %v561
    %617 = vst.msk [vmem:[%s2 + $0x38] sm:$0xff] %vm609, %v566
    %618 = vst.msk [vmem:[%s2 + $0x40] sm:$0xff] %vm609, %v571
    %619 = vst.msk [vmem:[%s2 + $0x48] sm:$0xff] %vm609, %v576
    %620 = vst.msk [vmem:[%s2 + $0x50] sm:$0xff] %vm609, %v581
    %621 = vst.msk [vmem:[%s2 + $0x58] sm:$0xff] %vm609, %v586
    %622 = vst.msk [vmem:[%s2 + $0x60] sm:$0xff] %vm609, %v591
    %623 = vst.msk [vmem:[%s2 + $0x68] sm:$0xff] %vm609, %v596
    %624 = vst.msk [vmem:[%s2 + $0x70] sm:$0xff] %vm609, %v601
    %625 = vst.msk [vmem:[%s2 + $0x78] sm:$0xff] %vm609, %v606
    // Predicated region
    $region14: #{tpu_custom_call.1} parent=1 // pred_check
      _
    $region15: #{tpu_custom_call.1} parent=1 // pred_check_branch
      %627 = sbr.rel (0) target = $region17
    $region16: #{tpu_custom_call.1} parent=1 // pred_region
      _
    $region17: #{tpu_custom_call.1} parent=1 // pred_fallthru
      _
    // Predicated region
    $region18: #{tpu_custom_call.1} parent=1 // pred_check
      _
    $region19: #{tpu_custom_call.1} parent=1 // pred_check_branch
      %629 = sbr.rel (0) target = $region21
    $region20: #{tpu_custom_call.1} parent=1 // pred_region
      _
    $region21: #{tpu_custom_call.1} parent=1 // pred_fallthru
      _
    %630 = vsyncpa [#allocation3], 1

</llo_original>
